<compile_context>
chip_gen: v6e
topology: v6e:2x2x1
jax: 0.10.0
libtpu: 0.0.40
codegen_flags: <defaults>
</compile_context>

<pallas_src>
import math

import jax
import jax.numpy as jnp
from jax import lax
from jax.experimental import pallas as pl
from jax.experimental.pallas import tpu as pltpu


def _round_up(x, m):
    return ((x + m - 1) // m) * m


def _pick_tile(full, cap, align):
    """Largest multiple of `align` that divides `full` and is <= cap."""
    cap = max(align, min(cap, full))
    t = (cap // align) * align
    while full % t:
        t -= align
    return t


# ---------------------------------------------------------------------------
# Kernels
# ---------------------------------------------------------------------------

def _train_kernel_single_k(x_ref, wm_ref, ws_ref, eo_ref, ei_ref,
                           bm_ref, bs_ref, be_ref, o_ref):
    """Whole In dim in one tile: y = x @ (Wm + Ws*(eo⊗ei)).T + (bm + bs*be)."""
    # Rank-1 noisy-weight build on the VPU (no dense epsilon matrix from HBM).
    w = wm_ref[...] + ws_ref[...] * (eo_ref[...] * ei_ref[...])
    acc = lax.dot_general(
        x_ref[...], w,
        dimension_numbers=(((1,), (1,)), ((), ())),   # contract stored last dims
        preferred_element_type=jnp.float32)
    bias = bm_ref[...] + bs_ref[...] * be_ref[...]    # f32 (1, tn)
    o_ref[...] = (acc + bias).astype(o_ref.dtype)


def _train_kernel_multi_k(x_ref, wm_ref, ws_ref, eo_ref, ei_ref,
                          bm_ref, bs_ref, be_ref, o_ref, acc_ref):
    """Fallback with a K reduction axis and a VMEM f32 accumulator."""
    k = pl.program_id(2)

    @pl.when(k == 0)
    def _init():
        acc_ref[...] = jnp.zeros_like(acc_ref)

    w = wm_ref[...] + ws_ref[...] * (eo_ref[...] * ei_ref[...])
    acc_ref[...] += lax.dot_general(
        x_ref[...], w,
        dimension_numbers=(((1,), (1,)), ((), ())),
        preferred_element_type=jnp.float32)

    @pl.when(k == pl.num_programs(2) - 1)
    def _finalize():
        bias = bm_ref[...] + bs_ref[...] * be_ref[...]
        o_ref[...] = (acc_ref[...] + bias).astype(o_ref.dtype)


def _eval_kernel_single_k(x_ref, wm_ref, bm_ref, o_ref):
    acc = lax.dot_general(
        x_ref[...], wm_ref[...],
        dimension_numbers=(((1,), (1,)), ((), ())),
        preferred_element_type=jnp.float32)
    o_ref[...] = (acc + bm_ref[...]).astype(o_ref.dtype)


def _eval_kernel_multi_k(x_ref, wm_ref, bm_ref, o_ref, acc_ref):
    k = pl.program_id(2)

    @pl.when(k == 0)
    def _init():
        acc_ref[...] = jnp.zeros_like(acc_ref)

    acc_ref[...] += lax.dot_general(
        x_ref[...], wm_ref[...],
        dimension_numbers=(((1,), (1,)), ((), ())),
        preferred_element_type=jnp.float32)

    @pl.when(k == pl.num_programs(2) - 1)
    def _finalize():
        o_ref[...] = (acc_ref[...] + bm_ref[...]).astype(o_ref.dtype)


# ---------------------------------------------------------------------------
# One-time parameter preparation (padding / reshaping / optional bf16 cast)
# ---------------------------------------------------------------------------

def prepare_noisy_linear_params(params, *, compute_dtype=jnp.float32):
    """Pad weights/noise to 128-multiples ONCE and record layer metadata.

    Do this at init time / whenever noise is resampled, not per forward call,
    so the forward pass never re-pads the (Out, In) matrices in HBM.
    Idempotent: already-prepared dicts are returned unchanged.
    """
    if params.get("_prepared", False):
        return params

    wm = params["weight_mean"]
    ws = params["weight_sigma"]
    Out, In = wm.shape
    Np, Kp = _round_up(Out, 128), _round_up(In, 128)

    def pad2(a, r, c):
        if a.shape == (r, c):
            return a
        return jnp.pad(a, ((0, r - a.shape[0]), (0, c - a.shape[1])))

    cd = compute_dtype
    eps_out = params["eps_out"]
    eps_in = params["eps_in"]
    bias_eps = params.get("bias_eps", eps_out)          # module: biasEpsilon = epsOut

    return dict(
        _prepared=True,
        out_features=Out,
        in_features=In,
        compute_dtype=cd,
        weight_mean=pad2(wm, Np, Kp).astype(cd),
        weight_sigma=pad2(ws, Np, Kp).astype(cd),
        eps_out=pad2(eps_out.reshape(Out, 1), Np, 1).astype(cd),      # (Np, 1)
        eps_in=pad2(eps_in.reshape(1, In), 1, Kp).astype(cd),         # (1, Kp)
        bias_mean=pad2(params["bias_mean"].reshape(1, Out), 1, Np).astype(jnp.float32),
        bias_sigma=pad2(params["bias_sigma"].reshape(1, Out), 1, Np).astype(jnp.float32),
        bias_eps=pad2(bias_eps.reshape(1, Out), 1, Np).astype(jnp.float32),
    )


# ---------------------------------------------------------------------------
# Forward wrapper
# ---------------------------------------------------------------------------

def noisy_linear_forward(x, params, *, training=True,
                         tm_cap=512, tn_cap=512, tk_cap=None,
                         vmem_budget_bytes=26 * 1024 * 1024):
    """NoisyLinearLayer.forward.

    training: y = x @ (Wm + Ws * outer(eps_out, eps_in)).T + (bm + bs * bias_eps)
    eval:     y = x @ Wm.T + bm   (separate kernel; no noise traffic)
    """
    params = prepare_noisy_linear_params(params)        # no-op if pre-prepared
    cd = params["compute_dtype"]
    out_dtype = x.dtype

    B, In = x.shape
    Out = params["out_features"]
    assert In == params["in_features"]
    Np, Kp = params["weight_mean"].shape

    c_isz = jnp.dtype(cd).itemsize
    o_isz = jnp.dtype(out_dtype).itemsize
    # Dtype-aware sublane alignment: (8,128) for 4-byte, (16,128) for 2-byte.
    sub = max(8, 32 // c_isz, 32 // o_isz)
    Mp = _round_up(B, sub)

    if tk_cap is None:
        tk_cap = 2048 if c_isz == 2 else 1024

    # Whole batch / whole In in one tile when they fit the VMEM budget.
    tm = _pick_tile(Mp, tm_cap, sub)
    tn = _pick_tile(Np, tn_cap, 128)
    tk = _pick_tile(Kp, tk_cap, 128)

    n_w = 2 if training else 1

    def ws_bytes(tm_, tn_, tk_):
        in_stream = 2 * (tm_ * tk_ + n_w * tn_ * tk_) * c_isz   # double-buffered
        out_stream = 2 * tm_ * tn_ * o_isz
        acc = tm_ * tn_ * 4 if (Kp // tk_) > 1 else 0
        return in_stream + out_stream + acc

    # Shrink tiles (K first, then N, then M) until the working set fits.
    while ws_bytes(tm, tn, tk) > vmem_budget_bytes:
        if tk > 128:
            tk = _pick_tile(Kp, tk - 128, 128)
        elif tn > 128:
            tn = _pick_tile(Np, tn - 128, 128)
        elif tm > sub:
            tm = _pick_tile(Mp, tm - sub, sub)
        else:
            break

    # v7x megacore: make sure the "parallel" part of the grid has >= 2 tiles
    # when the layer is big enough to split, so both TensorCores get work.
    if (Mp // tm) * (Np // tn) < 2 and Np >= 256:
        tn = _pick_tile(Np, tn // 2, 128)

    # Only the activations are padded per call (batch varies); weights were
    # padded once in prepare_noisy_linear_params.
    if x.shape == (Mp, Kp) and x.dtype == cd:
        xp = x
    else:
        xp = jnp.pad(x, ((0, Mp - B), (0, Kp - In))).astype(cd)

    k_steps = Kp // tk
    flops = 2 * Mp * Np * Kp
    bytes_accessed = (Mp * Kp + n_w * Np * Kp) * c_isz + Mp * Np * o_isz + 5 * Np * 4 + Kp * c_isz
    cost = pl.CostEstimate(flops=flops, transcendentals=0, bytes_accessed=bytes_accessed)
    out_shape = jax.ShapeDtypeStruct((Mp, Np), out_dtype)

    if k_steps == 1:
        # No reduction axis: single dot per (i, j) tile, no accumulator scratch.
        grid = (Mp // tm, Np // tn)
        x_spec = pl.BlockSpec((tm, Kp), lambda i, j: (i, 0))
        w_spec = pl.BlockSpec((tn, Kp), lambda i, j: (j, 0))
        col_spec = pl.BlockSpec((tn, 1), lambda i, j: (j, 0))     # eps_out column
        ei_spec = pl.BlockSpec((1, Kp), lambda i, j: (0, 0))      # eps_in: resident, DMA'd once
        row_spec = pl.BlockSpec((1, tn), lambda i, j: (0, j))     # bias rows
        out_spec = pl.BlockSpec((tm, tn), lambda i, j: (i, j))
        scratch = []
        cparams = pltpu.CompilerParams(
            dimension_semantics=("parallel", "parallel"),
            vmem_limit_bytes=32 * 1024 * 1024)
        train_kernel, eval_kernel = _train_kernel_single_k, _eval_kernel_single_k
    else:
        grid = (Mp // tm, Np // tn, k_steps)
        x_spec = pl.BlockSpec((tm, tk), lambda i, j, k: (i, k))
        w_spec = pl.BlockSpec((tn, tk), lambda i, j, k: (j, k))
        col_spec = pl.BlockSpec((tn, 1), lambda i, j, k: (j, 0))
        ei_spec = pl.BlockSpec((1, tk), lambda i, j, k: (0, k))
        row_spec = pl.BlockSpec((1, tn), lambda i, j, k: (0, j))
        out_spec = pl.BlockSpec((tm, tn), lambda i, j, k: (i, j))
        scratch = [pltpu.VMEM((tm, tn), jnp.float32)]
        cparams = pltpu.CompilerParams(
            dimension_semantics=("parallel", "parallel", "arbitrary"),
            vmem_limit_bytes=32 * 1024 * 1024)
        train_kernel, eval_kernel = _train_kernel_multi_k, _eval_kernel_multi_k

    if training:
        out = pl.pallas_call(
            train_kernel,
            out_shape=out_shape,
            grid=grid,
            in_specs=[
                x_spec,                 # x
                w_spec,                 # weight mean
                w_spec,                 # weight sigma
                col_spec,               # eps_out (Np, 1)
                ei_spec,                # eps_in  (1, Kp)
                row_spec,               # bias mean
                row_spec,               # bias sigma
                row_spec,               # bias eps
            ],
            out_specs=out_spec,
            scratch_shapes=scratch,
            compiler_params=cparams,
            cost_estimate=cost,
        )(xp, params["weight_mean"], params["weight_sigma"],
          params["eps_out"], params["eps_in"],
          params["bias_mean"], params["bias_sigma"], params["bias_eps"])
    else:
        out = pl.pallas_call(
            eval_kernel,
            out_shape=out_shape,
            grid=grid,
            in_specs=[x_spec, w_spec, row_spec],
            out_specs=out_spec,
            scratch_shapes=scratch,
            compiler_params=cparams,
            cost_estimate=cost,
        )(xp, params["weight_mean"], params["bias_mean"])

    return out[:B, :Out]


# ---------------------------------------------------------------------------
# Init (mirrors the PyTorch module's resetParameters / resetNoise)
# ---------------------------------------------------------------------------

def _scale_noise(key, size):
    # torch: x.sign() * x.abs().sqrt()
    x = jax.random.normal(key, (size,), dtype=jnp.float32)
    return jnp.sign(x) * jnp.sqrt(jnp.abs(x))


def init_noisy_linear(key, inputs, outputs, init_std):
    """Parameter + factorized-noise init mirroring the module (raw layout)."""
    k_wm, k_bm, k_ein, k_eout = jax.random.split(key, 4)
    mean_range = 1.0 / math.sqrt(inputs)

    weight_mean = jax.random.uniform(
        k_wm, (outputs, inputs), dtype=jnp.float32,
        minval=-mean_range, maxval=mean_range)
    weight_sigma = jnp.full((outputs, inputs),
                            init_std / math.sqrt(inputs), dtype=jnp.float32)
    bias_mean = jax.random.uniform(
        k_bm, (outputs,), dtype=jnp.float32,
        minval=-mean_range, maxval=mean_range)
    bias_sigma = jnp.full((outputs,),
                          init_std / math.sqrt(outputs), dtype=jnp.float32)

    eps_in = _scale_noise(k_ein, inputs)      # factorized noise kept as vectors:
    eps_out = _scale_noise(k_eout, outputs)   # weightEpsilon = epsOut ⊗ epsIn

    return dict(weight_mean=weight_mean, weight_sigma=weight_sigma,
                bias_mean=bias_mean, bias_sigma=bias_sigma,
                eps_in=eps_in, eps_out=eps_out, bias_eps=eps_out)


if __name__ == "__main__":
    key = jax.random.PRNGKey(0)
    k_param, k_x = jax.random.split(key)

    batch, inputs, outputs, init_std = 8, 32, 16, 0.5
    raw = init_noisy_linear(k_param, inputs, outputs, init_std)
    x = jax.random.normal(k_x, (batch, inputs), dtype=jnp.float32)

    # Pure-JAX reference (same math as functional.linear with fused noisy params).
    w_eff = raw["weight_mean"] + raw["weight_sigma"] * jnp.outer(raw["eps_out"], raw["eps_in"])
    b_eff = raw["bias_mean"] + raw["bias_sigma"] * raw["eps_out"]
    y_ref = x @ w_eff.T + b_eff
    y_eval_ref = x @ raw["weight_mean"].T + raw["bias_mean"]

    # --- f32: prepare once, then forward (training + eval) ------------------
    params = prepare_noisy_linear_params(raw)            # one-time pad / reshape
    y = jax.block_until_ready(noisy_linear_forward(x, params, training=True))
    assert y.shape == (batch, outputs)
    assert jnp.allclose(y, y_ref, atol=1e-5, rtol=1e-5)

    y_eval = jax.block_until_ready(noisy_linear_forward(x, params, training=False))
    assert jnp.allclose(y_eval, y_eval_ref, atol=1e-5, rtol=1e-5)

    # --- bf16 streaming path (halved HBM traffic; f32 accumulate) -----------
    params_bf16 = prepare_noisy_linear_params(raw, compute_dtype=jnp.bfloat16)
    y_bf16 = jax.block_until_ready(noisy_linear_forward(x, params_bf16, training=True))
    assert jnp.allclose(y_bf16, y_ref, atol=5e-2, rtol=5e-2)

    print("KERNEL_OK")
</pallas_src>

<mosaic_0001>
module attributes {stable_mosaic.version = 11 : i64} {
  func.func @_train_kernel_single_k(%arg0: i32, %arg1: i32, %arg2: memref<8x128xf32, #tpu.memory_space<vmem>>, %arg3: memref<128x128xf32, #tpu.memory_space<vmem>>, %arg4: memref<128x128xf32, #tpu.memory_space<vmem>>, %arg5: memref<128x1xf32, #tpu.memory_space<vmem>>, %arg6: memref<1x128xf32, #tpu.memory_space<vmem>>, %arg7: memref<1x128xf32, #tpu.memory_space<vmem>>, %arg8: memref<1x128xf32, #tpu.memory_space<vmem>>, %arg9: memref<1x128xf32, #tpu.memory_space<vmem>>, %arg10: memref<8x128xf32, #tpu.memory_space<vmem>>) attributes {dimension_semantics = [#tpu.dimension_semantics<parallel>, #tpu.dimension_semantics<parallel>], iteration_bounds = array<i64: 1, 1>, scalar_prefetch = 0 : i64, scratch_operands = 0 : i64, tpu.core_type = #tpu.core_type<tc>, window_params = [{transform_indices = @transform_0, window_bounds = array<i64: 8, 128>}, {transform_indices = @transform_1, window_bounds = array<i64: 128, 128>}, {transform_indices = @transform_2, window_bounds = array<i64: 128, 128>}, {transform_indices = @transform_3, window_bounds = array<i64: 128, 1>}, {pipeline_mode = #tpu.pipeline_mode<synchronous>, transform_indices = @transform_4, window_bounds = array<i64: 1, 128>}, {transform_indices = @transform_5, window_bounds = array<i64: 1, 128>}, {transform_indices = @transform_6, window_bounds = array<i64: 1, 128>}, {transform_indices = @transform_7, window_bounds = array<i64: 1, 128>}, {transform_indices = @transform_8, window_bounds = array<i64: 8, 128>}]} {
    %c0 = arith.constant 0 : index
    %c0_0 = arith.constant 0 : index
    %0 = vector.load %arg3[%c0, %c0_0] : memref<128x128xf32, #tpu.memory_space<vmem>>, vector<128x128xf32>
    %c0_1 = arith.constant 0 : index
    %c0_2 = arith.constant 0 : index
    %1 = vector.load %arg4[%c0_1, %c0_2] : memref<128x128xf32, #tpu.memory_space<vmem>>, vector<128x128xf32>
    %c0_3 = arith.constant 0 : index
    %c0_4 = arith.constant 0 : index
    %2 = vector.load %arg5[%c0_3, %c0_4] : memref<128x1xf32, #tpu.memory_space<vmem>>, vector<128x1xf32>
    %c0_5 = arith.constant 0 : index
    %c0_6 = arith.constant 0 : index
    %3 = vector.load %arg6[%c0_5, %c0_6] : memref<1x128xf32, #tpu.memory_space<vmem>>, vector<1x128xf32>
    %4 = vector.broadcast %2 : vector<128x1xf32> to vector<128x128xf32>
    %5 = vector.broadcast %3 : vector<1x128xf32> to vector<128x128xf32>
    %6 = arith.mulf %4, %5 : vector<128x128xf32>
    %7 = arith.mulf %1, %6 : vector<128x128xf32>
    %8 = arith.addf %0, %7 : vector<128x128xf32>
    %c0_7 = arith.constant 0 : index
    %c0_8 = arith.constant 0 : index
    %9 = vector.load %arg2[%c0_7, %c0_8] : memref<8x128xf32, #tpu.memory_space<vmem>>, vector<8x128xf32>
    %cst = arith.constant dense<0.000000e+00> : vector<8x128xf32>
    %10 = tpu.matmul %9, %8, %cst {dimension_numbers = #tpu.dot_dimension_numbers<[1], [1], [0], [0], [0, 0, 1, 0], [], []>} : vector<8x128xf32>, vector<128x128xf32>, vector<8x128xf32> -> vector<8x128xf32>
    %c0_9 = arith.constant 0 : index
    %c0_10 = arith.constant 0 : index
    %11 = vector.load %arg7[%c0_9, %c0_10] : memref<1x128xf32, #tpu.memory_space<vmem>>, vector<1x128xf32>
    %c0_11 = arith.constant 0 : index
    %c0_12 = arith.constant 0 : index
    %12 = vector.load %arg8[%c0_11, %c0_12] : memref<1x128xf32, #tpu.memory_space<vmem>>, vector<1x128xf32>
    %c0_13 = arith.constant 0 : index
    %c0_14 = arith.constant 0 : index
    %13 = vector.load %arg9[%c0_13, %c0_14] : memref<1x128xf32, #tpu.memory_space<vmem>>, vector<1x128xf32>
    %14 = arith.mulf %12, %13 : vector<1x128xf32>
    %15 = arith.addf %11, %14 : vector<1x128xf32>
    %16 = vector.broadcast %15 : vector<1x128xf32> to vector<8x128xf32>
    %17 = arith.addf %10, %16 : vector<8x128xf32>
    %c0_15 = arith.constant 0 : index
    %c0_16 = arith.constant 0 : index
    %18 = vector.load %arg10[%c0_15, %c0_16] : memref<8x128xf32, #tpu.memory_space<vmem>>, vector<8x128xf32>
    tpu.vector_store %arg10[%c0_15, %c0_16], %17 {strides = array<i32>} : memref<8x128xf32, #tpu.memory_space<vmem>>, vector<8x128xf32>,
    return
  }
  func.func @transform_0(%arg0: i32, %arg1: i32) -> (i32, i32) {
    %c0_i32 = arith.constant 0 : i32
    %c0_i32_0 = arith.constant 0 : i32
    return %arg0, %c0_i32 : i32, i32
  }
  func.func @transform_1(%arg0: i32, %arg1: i32) -> (i32, i32) {
    %c0_i32 = arith.constant 0 : i32
    %c0_i32_0 = arith.constant 0 : i32
    return %arg1, %c0_i32 : i32, i32
  }
  func.func @transform_2(%arg0: i32, %arg1: i32) -> (i32, i32) {
    %c0_i32 = arith.constant 0 : i32
    %c0_i32_0 = arith.constant 0 : i32
    return %arg1, %c0_i32 : i32, i32
  }
  func.func @transform_3(%arg0: i32, %arg1: i32) -> (i32, i32) {
    %c0_i32 = arith.constant 0 : i32
    %c0_i32_0 = arith.constant 0 : i32
    return %arg1, %c0_i32 : i32, i32
  }
  func.func @transform_4(%arg0: i32, %arg1: i32) -> (i32, i32) {
    %c0_i32 = arith.constant 0 : i32
    %c0_i32_0 = arith.constant 0 : i32
    %c0_i32_1 = arith.constant 0 : i32
    return %c0_i32, %c0_i32_0 : i32, i32
  }
  func.func @transform_5(%arg0: i32, %arg1: i32) -> (i32, i32) {
    %c0_i32 = arith.constant 0 : i32
    %c0_i32_0 = arith.constant 0 : i32
    return %c0_i32, %arg1 : i32, i32
  }
  func.func @transform_6(%arg0: i32, %arg1: i32) -> (i32, i32) {
    %c0_i32 = arith.constant 0 : i32
    %c0_i32_0 = arith.constant 0 : i32
    return %c0_i32, %arg1 : i32, i32
  }
  func.func @transform_7(%arg0: i32, %arg1: i32) -> (i32, i32) {
    %c0_i32 = arith.constant 0 : i32
    %c0_i32_0 = arith.constant 0 : i32
    return %c0_i32, %arg1 : i32, i32
  }
  func.func @transform_8(%arg0: i32, %arg1: i32) -> (i32, i32) {
    %c0_i32 = arith.constant 0 : i32
    return %arg0, %arg1 : i32, i32
  }
}

</mosaic_0001>

<llo_original>
// kernel: tpu_custom_call.1
$region0: #{tpu_custom_call.1}
  #allocation0 [shape = 'u32[]', space=smem, size = 0x4, offset = 0x4, fixed_abs, tag = 'smem constant byte address 0x4 - core index']
  #allocation1 [shape = 'u32[144,128]{1,0:T(1,128)}', space=vmem, size = 0x12000, scoped, tag = 'internal scratch']
  %s0 = inlined_call_operand.hbm [shape: f32[8,128], index: 0, kind: input, shape index: {}]
  %s1 = inlined_call_operand.vmem [shape: f32[128,128], index: 1, kind: input, shape index: {}]
  %s2 = inlined_call_operand.hbm [shape: f32[128,128], index: 2, kind: input, shape index: {}]
  %s3 = inlined_call_operand.vmem [shape: f32[128,1], index: 3, kind: input, shape index: {}]
  %s4 = inlined_call_operand.vmem [shape: f32[1,128], index: 4, kind: input, shape index: {}]
  %s5 = inlined_call_operand.vmem [shape: f32[1,128], index: 5, kind: input, shape index: {}]
  %s6 = inlined_call_operand.vmem [shape: f32[1,128], index: 6, kind: input, shape index: {}]
  %s7 = inlined_call_operand.vmem [shape: f32[1,128], index: 7, kind: input, shape index: {}]
  %s8 = inlined_call_operand.hbm [shape: f32[8,128], index: 8, kind: output, shape index: {}]
  %s9 = sld [smem:[#allocation0]]
  $region50: #{tpu_custom_call.1} parent=0
    _
  %s11 = ssub.s32 1, %s9
  %s12 = scalar_select 0, %s11, %s9
  $region1: #{tpu_custom_call.1} parent=0
    #allocation2 [shape = 'u8[4096]{0}', space=vmem, size = 0x1000, scoped, tag = 'input window, operand 0, single buffered']
    #allocation3 [shape = 's32[1]{0}', space=sflag, size = 0x4, scoped, tag = 'scoped memory for tpu_custom_call.1']
    #allocation4 [shape = 's32[1]{0}', space=sflag, size = 0x4, scoped, tag = 'scoped memory for tpu_custom_call.1']
    #allocation5 [shape = 'u8[65536]{0}', space=vmem, size = 0x10000, scoped, tag = 'input window, operand 2, single buffered']
    #allocation6 [shape = 's32[1]{0}', space=sflag, size = 0x4, scoped, tag = 'scoped memory for tpu_custom_call.1']
    #allocation7 [shape = 'u8[4096]{0}', space=vmem, size = 0x1000, scoped, tag = 'output window, operand 0, single buffered']
    %13 = vsyncpa [#allocation3], 0
    %14 = vsyncpa [#allocation6], 0
    %15 = vsyncpa [#allocation4], 0
    // Predicated region
    $region2: #{tpu_custom_call.1} parent=1 // pred_check
      _
    $region3: #{tpu_custom_call.1} parent=1 // pred_check_branch
      %17 = sbr.rel (0) target = $region5
    $region4: #{tpu_custom_call.1} parent=1 // pred_region
      %s19 = ssub.s32 128, 128
      %20 = vsyncadd [#allocation3], %s19
      %s22 = sshll.u32 [#allocation2], 4
      %s23 = int_to_ptr.vmem [resolvable:$true] %s22
      %25 = dma.hbm_to_vmem [thread:$0]  %s0, 128, %s23, [#allocation3]
    $region5: #{tpu_custom_call.1} parent=1 // pred_fallthru
      _
    // Predicated region
    $region6: #{tpu_custom_call.1} parent=1 // pred_check
      _
    $region7: #{tpu_custom_call.1} parent=1 // pred_check_branch
      %27 = sbr.rel (0) target = $region9
    $region8: #{tpu_custom_call.1} parent=1 // pred_region
      _
    $region9: #{tpu_custom_call.1} parent=1 // pred_fallthru
      _
    // Predicated region
    $region10: #{tpu_custom_call.1} parent=1 // pred_check
      _
    $region11: #{tpu_custom_call.1} parent=1 // pred_check_branch
      %29 = sbr.rel (0) target = $region13
    $region12: #{tpu_custom_call.1} parent=1 // pred_region
      %s31 = ssub.s32 2048, 2048
      %32 = vsyncadd [#allocation6], %s31
      %s33 = sshll.u32 [#allocation5], 4
      %s34 = int_to_ptr.vmem [resolvable:$true] %s33
      %39 = dma.hbm_to_vmem [thread:$0]  %s2, 2048, %s34, [#allocation6], 128, 128, 8
    $region13: #{tpu_custom_call.1} parent=1 // pred_fallthru
      _
    // Predicated region
    $region14: #{tpu_custom_call.1} parent=1 // pred_check
      _
    $region15: #{tpu_custom_call.1} parent=1 // pred_check_branch
      %41 = sbr.rel (0) target = $region17
    $region16: #{tpu_custom_call.1} parent=1 // pred_region
      _
    $region17: #{tpu_custom_call.1} parent=1 // pred_fallthru
      _
    // Predicated region
    $region18: #{tpu_custom_call.1} parent=1 // pred_check
      _
    $region19: #{tpu_custom_call.1} parent=1 // pred_check_branch
      %43 = sbr.rel (0) target = $region21
    $region20: #{tpu_custom_call.1} parent=1 // pred_region
      _
    $region21: #{tpu_custom_call.1} parent=1 // pred_fallthru
      _
    // Predicated region
    $region22: #{tpu_custom_call.1} parent=1 // pred_check
      _
    $region23: #{tpu_custom_call.1} parent=1 // pred_check_branch
      %45 = sbr.rel (0) target = $region25
    $region24: #{tpu_custom_call.1} parent=1 // pred_region
      _
    $region25: #{tpu_custom_call.1} parent=1 // pred_fallthru
      _
    // Predicated region
    $region26: #{tpu_custom_call.1} parent=1 // pred_check
      _
    $region27: #{tpu_custom_call.1} parent=1 // pred_check_branch
      %47 = sbr.rel (0) target = $region29
    $region28: #{tpu_custom_call.1} parent=1 // pred_region
      _
    $region29: #{tpu_custom_call.1} parent=1 // pred_fallthru
      _
    // Predicated region
    $region30: #{tpu_custom_call.1} parent=1 // pred_check
      _
    $region31: #{tpu_custom_call.1} parent=1 // pred_check_branch
      %49 = sbr.rel (0) target = $region33
    $region32: #{tpu_custom_call.1} parent=1 // pred_region
      _
    $region33: #{tpu_custom_call.1} parent=1 // pred_fallthru
      _
    // Predicated region
    $region34: #{tpu_custom_call.1} parent=1 // pred_check
      _
    $region35: #{tpu_custom_call.1} parent=1 // pred_check_branch
      %51 = sbr.rel (0) target = $region37
    $region36: #{tpu_custom_call.1} parent=1 // pred_region
      %52 = dma.done [#allocation3], 128
    $region37: #{tpu_custom_call.1} parent=1 // pred_fallthru
      _
    // Predicated region
    $region38: #{tpu_custom_call.1} parent=1 // pred_check
      _
    $region39: #{tpu_custom_call.1} parent=1 // pred_check_branch
      %54 = sbr.rel (0) target = $region41
    $region40: #{tpu_custom_call.1} parent=1 // pred_region
      %55 = dma.done [#allocation6], 2048
    $region41: #{tpu_custom_call.1} parent=1 // pred_fallthru
      _
    %v56 = vld [vmem:[%s1] sm:$0xff]
    %v57 = vld [vmem:[%s1 + $0x8] sm:$0xff]
    %v58 = vld [vmem:[%s1 + $0x10] sm:$0xff]
    %v59 = vld [vmem:[%s1 + $0x18] sm:$0xff]
    %v60 = vld [vmem:[%s1 + $0x20] sm:$0xff]
    %v61 = vld [vmem:[%s1 + $0x28] sm:$0xff]
    %v62 = vld [vmem:[%s1 + $0x30] sm:$0xff]
    %v63 = vld [vmem:[%s1 + $0x38] sm:$0xff]
    %v64 = vld [vmem:[%s1 + $0x40] sm:$0xff]
    %v65 = vld [vmem:[%s1 + $0x48] sm:$0xff]
    %v66 = vld [vmem:[%s1 + $0x50] sm:$0xff]
    %v67 = vld [vmem:[%s1 + $0x58] sm:$0xff]
    %v68 = vld [vmem:[%s1 + $0x60] sm:$0xff]
    %v69 = vld [vmem:[%s1 + $0x68] sm:$0xff]
    %v70 = vld [vmem:[%s1 + $0x70] sm:$0xff]
    %v71 = vld [vmem:[%s1 + $0x78] sm:$0xff]
    %v72 = vld [vmem:[#allocation5] sm:$0xff]
    %v73 = vld [vmem:[#allocation5 + $0x8] sm:$0xff]
    %v74 = vld [vmem:[#allocation5 + $0x10] sm:$0xff]
    %v75 = vld [vmem:[#allocation5 + $0x18] sm:$0xff]
    %v76 = vld [vmem:[#allocation5 + $0x20] sm:$0xff]
    %v77 = vld [vmem:[#allocation5 + $0x28] sm:$0xff]
    %v78 = vld [vmem:[#allocation5 + $0x30] sm:$0xff]
    %v79 = vld [vmem:[#allocation5 + $0x38] sm:$0xff]
    %v80 = vld [vmem:[#allocation5 + $0x40] sm:$0xff]
    %v81 = vld [vmem:[#allocation5 + $0x48] sm:$0xff]
    %v82 = vld [vmem:[#allocation5 + $0x50] sm:$0xff]
    %v83 = vld [vmem:[#allocation5 + $0x58] sm:$0xff]
    %v84 = vld [vmem:[#allocation5 + $0x60] sm:$0xff]
    %v85 = vld [vmem:[#allocation5 + $0x68] sm:$0xff]
    %v86 = vld [vmem:[#allocation5 + $0x70] sm:$0xff]
    %v87 = vld [vmem:[#allocation5 + $0x78] sm:$0xff]
    %v88 = vld [vmem:[%s3] sm:$0xff]
    %v89 = vld [vmem:[%s3 + $0x8] sm:$0xff]
    %v90 = vld [vmem:[%s3 + $0x10] sm:$0xff]
    %v91 = vld [vmem:[%s3 + $0x18] sm:$0xff]
    %v92 = vld [vmem:[%s3 + $0x20] sm:$0xff]
    %v93 = vld [vmem:[%s3 + $0x28] sm:$0xff]
    %v94 = vld [vmem:[%s3 + $0x30] sm:$0xff]
    %v95 = vld [vmem:[%s3 + $0x38] sm:$0xff]
    %v96 = vld [vmem:[%s3 + $0x40] sm:$0xff]
    %v97 = vld [vmem:[%s3 + $0x48] sm:$0xff]
    %v98 = vld [vmem:[%s3 + $0x50] sm:$0xff]
    %v99 = vld [vmem:[%s3 + $0x58] sm:$0xff]
    %v100 = vld [vmem:[%s3 + $0x60] sm:$0xff]
    %v101 = vld [vmem:[%s3 + $0x68] sm:$0xff]
    %v102 = vld [vmem:[%s3 + $0x70] sm:$0xff]
    %v103 = vld [vmem:[%s3 + $0x78] sm:$0xff]
    %v104 = vld [vmem:[%s4] sm:$0x1]
    %106 = vset.pattern.permute.xlu0 0
    %107 = vperm.xlu0 %106, %v88
    %v108 = vpop.permute.xlu0 %107
    %111 = vset.pattern.permute.xlu0 0
    %112 = vperm.xlu0 %111, %v89
    %v113 = vpop.permute.xlu0 %112
    %116 = vset.pattern.permute.xlu0 0
    %117 = vperm.xlu0 %116, %v90
    %v118 = vpop.permute.xlu0 %117
    %121 = vset.pattern.permute.xlu0 0
    %122 = vperm.xlu0 %121, %v91
    %v123 = vpop.permute.xlu0 %122
    %126 = vset.pattern.permute.xlu0 0
    %127 = vperm.xlu0 %126, %v92
    %v128 = vpop.permute.xlu0 %127
    %131 = vset.pattern.permute.xlu0 0
    %132 = vperm.xlu0 %131, %v93
    %v133 = vpop.permute.xlu0 %132
    %136 = vset.pattern.permute.xlu0 0
    %137 = vperm.xlu0 %136, %v94
    %v138 = vpop.permute.xlu0 %137
    %141 = vset.pattern.permute.xlu0 0
    %142 = vperm.xlu0 %141, %v95
    %v143 = vpop.permute.xlu0 %142
    %146 = vset.pattern.permute.xlu0 0
    %147 = vperm.xlu0 %146, %v96
    %v148 = vpop.permute.xlu0 %147
    %151 = vset.pattern.permute.xlu0 0
    %152 = vperm.xlu0 %151, %v97
    %v153 = vpop.permute.xlu0 %152
    %156 = vset.pattern.permute.xlu0 0
    %157 = vperm.xlu0 %156, %v98
    %v158 = vpop.permute.xlu0 %157
    %161 = vset.pattern.permute.xlu0 0
    %162 = vperm.xlu0 %161, %v99
    %v163 = vpop.permute.xlu0 %162
    %166 = vset.pattern.permute.xlu0 0
    %167 = vperm.xlu0 %166, %v100
    %v168 = vpop.permute.xlu0 %167
    %171 = vset.pattern.permute.xlu0 0
    %172 = vperm.xlu0 %171, %v101
    %v173 = vpop.permute.xlu0 %172
    %176 = vset.pattern.permute.xlu0 0
    %177 = vperm.xlu0 %176, %v102
    %v178 = vpop.permute.xlu0 %177
    %181 = vset.pattern.permute.xlu0 0
    %182 = vperm.xlu0 %181, %v103
    %v183 = vpop.permute.xlu0 %182
    %v186 = vlaneseq
    %v187 = vshrl.u32 %v186, 7
    %v188 = vsub.s32 0, %v187
    %v189 = vrot.slane %v104, %v188
    %v191 = vmul.f32 %v108, %v189
    %v192 = vmul.f32 %v113, %v189
    %v193 = vmul.f32 %v118, %v189
    %v194 = vmul.f32 %v123, %v189
    %v195 = vmul.f32 %v128, %v189
    %v196 = vmul.f32 %v133, %v189
    %v197 = vmul.f32 %v138, %v189
    %v198 = vmul.f32 %v143, %v189
    %v199 = vmul.f32 %v148, %v189
    %v200 = vmul.f32 %v153, %v189
    %v201 = vmul.f32 %v158, %v189
    %v202 = vmul.f32 %v163, %v189
    %v203 = vmul.f32 %v168, %v189
    %v204 = vmul.f32 %v173, %v189
    %v205 = vmul.f32 %v178, %v189
    %v206 = vmul.f32 %v183, %v189
    %v207 = vmul.f32 %v72, %v191
    %v208 = vmul.f32 %v73, %v192
    %v209 = vmul.f32 %v74, %v193
    %v210 = vmul.f32 %v75, %v194
    %v211 = vmul.f32 %v76, %v195
    %v212 = vmul.f32 %v77, %v196
    %v213 = vmul.f32 %v78, %v197
    %v214 = vmul.f32 %v79, %v198
    %v215 = vmul.f32 %v80, %v199
    %v216 = vmul.f32 %v81, %v200
    %v217 = vmul.f32 %v82, %v201
    %v218 = vmul.f32 %v83, %v202
    %v219 = vmul.f32 %v84, %v203
    %v220 = vmul.f32 %v85, %v204
    %v221 = vmul.f32 %v86, %v205
    %v222 = vmul.f32 %v87, %v206
    %v223 = vadd.f32 %v56, %v207
    %v224 = vadd.f32 %v57, %v208
    %v225 = vadd.f32 %v58, %v209
    %v226 = vadd.f32 %v59, %v210
    %v227 = vadd.f32 %v60, %v211
    %v228 = vadd.f32 %v61, %v212
    %v229 = vadd.f32 %v62, %v213
    %v230 = vadd.f32 %v63, %v214
    %v231 = vadd.f32 %v64, %v215
    %v232 = vadd.f32 %v65, %v216
    %v233 = vadd.f32 %v66, %v217
    %v234 = vadd.f32 %v67, %v218
    %v235 = vadd.f32 %v68, %v219
    %v236 = vadd.f32 %v69, %v220
    %v237 = vadd.f32 %v70, %v221
    %v238 = vadd.f32 %v71, %v222
    %v239 = vld [vmem:[#allocation2] sm:$0xff]
    %v240 = vld [vmem:[%s5] sm:$0x1]
    %v241 = vld [vmem:[%s6] sm:$0x1]
    %v242 = vld [vmem:[%s7] sm:$0x1]
    %v243 = vmul.f32 %v241, %v242
    %v244 = vadd.f32 %v240, %v243
    %v246 = vlaneseq
    %v247 = vshrl.u32 %v246, 7
    %v248 = vsub.s32 0, %v247
    %v249 = vrot.slane %v244, %v248
    %251 = vmatprep.subr.mxu0 0.0
    %252 = vmatpush1.xpose.msra.mxu0 %v238
    %253 = vmatprep.subr.mxu0 0.0
    %254 = vmatpush1.xpose.msra.mxu0 %v237
    %255 = vmatprep.subr.mxu0 0.0
    %256 = vmatpush1.xpose.msra.mxu0 %v236
    %257 = vmatprep.subr.mxu0 0.0
    %258 = vmatpush1.xpose.msra.mxu0 %v235
    %259 = vmatprep.subr.mxu0 0.0
    %260 = vmatpush1.xpose.msra.mxu0 %v234
    %261 = vmatprep.subr.mxu0 0.0
    %262 = vmatpush1.xpose.msra.mxu0 %v233
    %263 = vmatprep.subr.mxu0 0.0
    %264 = vmatpush1.xpose.msra.mxu0 %v232
    %265 = vmatprep.subr.mxu0 0.0
    %266 = vmatpush1.xpose.msra.mxu0 %v231
    %267 = vmatprep.subr.mxu0 0.0
    %268 = vmatpush1.xpose.msra.mxu0 %v230
    %269 = vmatprep.subr.mxu0 0.0
    %270 = vmatpush1.xpose.msra.mxu0 %v229
    %271 = vmatprep.subr.mxu0 0.0
    %272 = vmatpush1.xpose.msra.mxu0 %v228
    %273 = vmatprep.subr.mxu0 0.0
    %274 = vmatpush1.xpose.msra.mxu0 %v227
    %275 = vmatprep.subr.mxu0 0.0
    %276 = vmatpush1.xpose.msra.mxu0 %v226
    %277 = vmatprep.subr.mxu0 0.0
    %278 = vmatpush1.xpose.msra.mxu0 %v225
    %279 = vmatprep.subr.mxu0 0.0
    %280 = vmatpush1.xpose.msra.mxu0 %v224
    %281 = vmatprep.subr.mxu0 0.0
    %282 = vmatpush1.xpose.msra.mxu0 %v223
    %283 = vmatprep.subr.mxu0 0.0
    %284 = vmatpush2.xpose.msra.mxu0 0.0
    %285 = vmatprep.subr.mxu0 0.0
    %286 = vmatpush2.xpose.msra.mxu0 0.0
    %287 = vmatprep.subr.mxu0 0.0
    %288 = vmatpush2.xpose.msra.mxu0 0.0
    %289 = vmatprep.subr.mxu0 0.0
    %290 = vmatpush2.xpose.msra.mxu0 0.0
    %291 = vmatprep.subr.mxu0 0.0
    %292 = vmatpush2.xpose.msra.mxu0 0.0
    %293 = vmatprep.subr.mxu0 0.0
    %294 = vmatpush2.xpose.msra.mxu0 0.0
    %295 = vmatprep.subr.mxu0 0.0
    %296 = vmatpush2.xpose.msra.mxu0 0.0
    %297 = vmatprep.subr.mxu0 0.0
    %298 = vmatpush2.xpose.msra.mxu0 0.0
    %299 = vmatprep.subr.mxu0 0.0
    %300 = vmatpush2.xpose.msra.mxu0 0.0
    %301 = vmatprep.subr.mxu0 0.0
    %302 = vmatpush2.xpose.msra.mxu0 0.0
    %303 = vmatprep.subr.mxu0 0.0
    %304 = vmatpush2.xpose.msra.mxu0 0.0
    %305 = vmatprep.subr.mxu0 0.0
    %306 = vmatpush2.xpose.msra.mxu0 0.0
    %307 = vmatprep.subr.mxu0 0.0
    %308 = vmatpush2.xpose.msra.mxu0 0.0
    %309 = vmatprep.subr.mxu0 0.0
    %310 = vmatpush2.xpose.msra.mxu0 0.0
    %311 = vmatprep.subr.mxu0 0.0
    %312 = vmatpush2.xpose.msra.mxu0 0.0
    %313 = vmatprep.subr.mxu0 0.0
    %314 = vmatpush2.xpose.msra.mxu0 0.0
    %315 = vmatprep.mubr.f32.mxu0 0.0
    %316 = vmatmul.mubr.f32.gmra.mxu0 %v239
    %v317 = vpop.f32.mrf.mxu0
    %v318 = vadd.f32 %v249, %v317
    %v319 = vpop.f32.mrf.mxu0
    %320 = vdwg.mxu0
    %321 = vst [vmem:[#allocation7] sm:$0xff] %v318
    // Predicated region
    $region42: #{tpu_custom_call.1} parent=1 // pred_check
      _
    $region43: #{tpu_custom_call.1} parent=1 // pred_check_branch
      %323 = sbr.rel (0) target = $region45
    $region44: #{tpu_custom_call.1} parent=1 // pred_region
      %s325 = ssub.s32 128, 128
      %326 = vsyncadd [#allocation4], %s325
      %s328 = sshll.u32 [#allocation7], 4
      %s329 = int_to_ptr.vmem [resolvable:$true] %s328
      %331 = dma.vmem_to_hbm [thread:$0]  %s329, 128, %s8, [#allocation4]
    $region45: #{tpu_custom_call.1} parent=1 // pred_fallthru
      _
    // Predicated region
    $region46: #{tpu_custom_call.1} parent=1 // pred_check
      _
    $region47: #{tpu_custom_call.1} parent=1 // pred_check_branch
      %333 = sbr.rel (0) target = $region49
    $region48: #{tpu_custom_call.1} parent=1 // pred_region
      %334 = dma.done [#allocation4], 128
    $region49: #{tpu_custom_call.1} parent=1 // pred_fallthru
      _
    %335 = vsyncpa [#allocation3], 1
    %336 = vsyncpa [#allocation6], 1
    %337 = vsyncpa [#allocation4], 1

</llo_original>
